<compile_context>
chip_gen: v5e
topology: v5e:2x2
jax: 0.10.0
libtpu: 0.0.40
codegen_flags: <defaults>
</compile_context>

<pallas_src>
import jax
import jax.numpy as jnp
from jax.experimental import pallas as pl
from jax.experimental.pallas import tpu as pltpu


_LANES = 128
_TARGET_BLOCK_BYTES = 4 * 1024 * 1024   # per array per grid step
_VMEM_LIMIT_BYTES = 32 * 1024 * 1024    # in+out double-buffered -> ~16 MiB used


def _unnormalize_kernel(x_ref, std_ref, mean_ref, o_ref):
    # x_ref / o_ref    : VMEM (nb, C, rb, 128) tiles
    # std_ref/mean_ref : VMEM (1, C, 1, 1) tiles, broadcast over batch/rows/lanes
    o_ref[...] = x_ref[...] * std_ref[...] + mean_ref[...]


def _round_down(v, m):
    return (v // m) * m


def _round_up(v, m):
    return ((v + m - 1) // m) * m


def _run_lane_dense(x_r, std, mean):
    """x_r: (N, C, R, 128) lane-dense input. Returns x_r * std + mean."""
    N, C, R, _ = x_r.shape
    itemsize = jnp.dtype(x_r.dtype).itemsize
    # dtype-aware sublane granule: 8 rows for f32, 16 for bf16, 32 for int8/fp8
    granule = max(1, (8 * 4) // itemsize)

    # VMEM footprint of one sample's slab (sublane dim pads to the granule).
    r_vmem = max(granule, _round_up(R, granule))
    per_sample_vmem = C * r_vmem * _LANES * itemsize

    if per_sample_vmem >= _TARGET_BLOCK_BYTES:
        # Big samples: one sample per step, split the row dim to ~target bytes.
        nb = 1
        rb = _round_down(
            max(granule, _TARGET_BLOCK_BYTES // (C * _LANES * itemsize)), granule)
        rb = min(max(granule, rb), R)   # either full R or a granule multiple
    else:
        # Small samples: fold several samples into one block per step.
        rb = R
        nb = min(N, max(1, _TARGET_BLOCK_BYTES // per_sample_vmem))

    # v7x megacore: both TensorCores only get work if there are >= 2 grid steps.
    if pl.cdiv(N, nb) * pl.cdiv(R, rb) < 2:
        if nb > 1:
            nb = pl.cdiv(N, 2)
        elif N == 1 and R > granule and rb > granule:
            rb = min(R, max(granule, _round_up(pl.cdiv(R, 2), granule)))

    grid = (pl.cdiv(N, nb), pl.cdiv(R, rb))

    flops = 2 * N * C * R * _LANES                       # one mul + one add / elem
    bytes_accessed = 2 * N * C * R * _LANES * itemsize + 2 * C * itemsize

    return pl.pallas_call(
        _unnormalize_kernel,
        out_shape=jax.ShapeDtypeStruct((N, C, R, _LANES), x_r.dtype),
        grid=grid,
        in_specs=[
            pl.BlockSpec((nb, C, rb, _LANES), lambda n, r: (n, 0, r, 0)),
            pl.BlockSpec((1, C, 1, 1), lambda n, r: (0, 0, 0, 0)),
            pl.BlockSpec((1, C, 1, 1), lambda n, r: (0, 0, 0, 0)),
        ],
        out_specs=pl.BlockSpec((nb, C, rb, _LANES), lambda n, r: (n, 0, r, 0)),
        compiler_params=pltpu.CompilerParams(
            dimension_semantics=("parallel", "parallel"),
            vmem_limit_bytes=_VMEM_LIMIT_BYTES,
        ),
        cost_estimate=pl.CostEstimate(
            flops=flops, bytes_accessed=bytes_accessed, transcendentals=0),
    )(x_r, std, mean)


@jax.jit
def unnormalize(x, mean, std):
    """Pallas equivalent of UnNormalize.forward."""
    N, C, H, W = x.shape
    mean = jnp.asarray(mean, dtype=x.dtype).reshape(1, C, 1, 1)
    std = jnp.asarray(std, dtype=x.dtype).reshape(1, C, 1, 1)

    hw = H * W
    if hw % _LANES == 0:
        # Lane-dense layout; reshape is free (metadata) under jit.
        out = _run_lane_dense(x.reshape(N, C, hw // _LANES, _LANES), std, mean)
        return out.reshape(N, C, H, W)

    # Fallback: pad the flattened spatial dim up to a multiple of 128, reuse
    # the lane-dense path (bounded per-step VMEM, unmasked stores), then slice.
    hw_pad = _round_up(hw, _LANES)
    x_flat = jnp.pad(x.reshape(N, C, hw), ((0, 0), (0, 0), (0, hw_pad - hw)))
    out = _run_lane_dense(
        x_flat.reshape(N, C, hw_pad // _LANES, _LANES), std, mean)
    return out.reshape(N, C, hw_pad)[:, :, :hw].reshape(N, C, H, W)


if __name__ == "__main__":
    key = jax.random.PRNGKey(0)
    N, C, H, W = 2, 4, 16, 16
    x = jax.random.normal(key, (N, C, H, W), dtype=jnp.float32)

    # Deterministic "parameters" (what torch.Tensor(mean/std) would hold)
    mean = jnp.array([0.485, 0.456, 0.406, 0.5], dtype=jnp.float32)
    std = jnp.array([0.229, 0.224, 0.225, 0.25], dtype=jnp.float32)

    out = jax.block_until_ready(unnormalize(x, mean, std))
    ref = x * std[None, :, None, None] + mean[None, :, None, None]
    assert out.shape == (N, C, H, W)
    assert jnp.allclose(out, ref, atol=1e-6), "mismatch vs reference (main path)"

    # Also exercise the non-128-aligned fallback path (H*W = 100).
    x2 = jax.random.normal(jax.random.PRNGKey(1), (N, C, 10, 10), dtype=jnp.float32)
    out2 = jax.block_until_ready(unnormalize(x2, mean, std))
    ref2 = x2 * std[None, :, None, None] + mean[None, :, None, None]
    assert jnp.allclose(out2, ref2, atol=1e-6), "mismatch vs reference (fallback)"

    print("KERNEL_OK")
</pallas_src>

<mosaic_0001>
module attributes {stable_mosaic.version = 11 : i64} {
  func.func @_unnormalize_kernel(%arg0: i32, %arg1: i32, %arg2: memref<1x4x2x128xf32, #tpu.memory_space<vmem>>, %arg3: memref<1x4x1x1xf32, #tpu.memory_space<vmem>>, %arg4: memref<1x4x1x1xf32, #tpu.memory_space<vmem>>, %arg5: memref<1x4x2x128xf32, #tpu.memory_space<vmem>>) attributes {dimension_semantics = [#tpu.dimension_semantics<parallel>, #tpu.dimension_semantics<parallel>], iteration_bounds = array<i64: 2, 1>, scalar_prefetch = 0 : i64, scratch_operands = 0 : i64, tpu.core_type = #tpu.core_type<tc>, window_params = [{transform_indices = @transform_0, window_bounds = array<i64: 1, 4, 2, 128>}, {pipeline_mode = #tpu.pipeline_mode<synchronous>, transform_indices = @transform_1, window_bounds = array<i64: 1, 4, 1, 1>}, {pipeline_mode = #tpu.pipeline_mode<synchronous>, transform_indices = @transform_2, window_bounds = array<i64: 1, 4, 1, 1>}, {transform_indices = @transform_3, window_bounds = array<i64: 1, 4, 2, 128>}]} {
    %c0 = arith.constant 0 : index
    %c0_0 = arith.constant 0 : index
    %c0_1 = arith.constant 0 : index
    %c0_2 = arith.constant 0 : index
    %0 = vector.load %arg2[%c0, %c0_0, %c0_1, %c0_2] : memref<1x4x2x128xf32, #tpu.memory_space<vmem>>, vector<1x4x2x128xf32>
    %c0_3 = arith.constant 0 : index
    %c0_4 = arith.constant 0 : index
    %c0_5 = arith.constant 0 : index
    %c0_6 = arith.constant 0 : index
    %1 = vector.load %arg3[%c0_3, %c0_4, %c0_5, %c0_6] : memref<1x4x1x1xf32, #tpu.memory_space<vmem>>, vector<1x4x1x1xf32>
    %2 = vector.broadcast %1 : vector<1x4x1x1xf32> to vector<1x4x2x128xf32>
    %3 = arith.mulf %0, %2 : vector<1x4x2x128xf32>
    %c0_7 = arith.constant 0 : index
    %c0_8 = arith.constant 0 : index
    %c0_9 = arith.constant 0 : index
    %c0_10 = arith.constant 0 : index
    %4 = vector.load %arg4[%c0_7, %c0_8, %c0_9, %c0_10] : memref<1x4x1x1xf32, #tpu.memory_space<vmem>>, vector<1x4x1x1xf32>
    %5 = vector.broadcast %4 : vector<1x4x1x1xf32> to vector<1x4x2x128xf32>
    %6 = arith.addf %3, %5 : vector<1x4x2x128xf32>
    %c0_11 = arith.constant 0 : index
    %c0_12 = arith.constant 0 : index
    %c0_13 = arith.constant 0 : index
    %c0_14 = arith.constant 0 : index
    %7 = vector.load %arg5[%c0_11, %c0_12, %c0_13, %c0_14] : memref<1x4x2x128xf32, #tpu.memory_space<vmem>>, vector<1x4x2x128xf32>
    tpu.vector_store %arg5[%c0_11, %c0_12, %c0_13, %c0_14], %6 {strides = array<i32>} : memref<1x4x2x128xf32, #tpu.memory_space<vmem>>, vector<1x4x2x128xf32>,
    return
  }
  func.func @transform_0(%arg0: i32, %arg1: i32) -> (i32, i32, i32, i32) {
    %c0_i32 = arith.constant 0 : i32
    %c0_i32_0 = arith.constant 0 : i32
    %c0_i32_1 = arith.constant 0 : i32
    return %arg0, %c0_i32, %arg1, %c0_i32_0 : i32, i32, i32, i32
  }
  func.func @transform_1(%arg0: i32, %arg1: i32) -> (i32, i32, i32, i32) {
    %c0_i32 = arith.constant 0 : i32
    %c0_i32_0 = arith.constant 0 : i32
    %c0_i32_1 = arith.constant 0 : i32
    %c0_i32_2 = arith.constant 0 : i32
    %c0_i32_3 = arith.constant 0 : i32
    return %c0_i32, %c0_i32_0, %c0_i32_1, %c0_i32_2 : i32, i32, i32, i32
  }
  func.func @transform_2(%arg0: i32, %arg1: i32) -> (i32, i32, i32, i32) {
    %c0_i32 = arith.constant 0 : i32
    %c0_i32_0 = arith.constant 0 : i32
    %c0_i32_1 = arith.constant 0 : i32
    %c0_i32_2 = arith.constant 0 : i32
    %c0_i32_3 = arith.constant 0 : i32
    return %c0_i32, %c0_i32_0, %c0_i32_1, %c0_i32_2 : i32, i32, i32, i32
  }
  func.func @transform_3(%arg0: i32, %arg1: i32) -> (i32, i32, i32, i32) {
    %c0_i32 = arith.constant 0 : i32
    %c0_i32_0 = arith.constant 0 : i32
    %c0_i32_1 = arith.constant 0 : i32
    return %arg0, %c0_i32, %arg1, %c0_i32_0 : i32, i32, i32, i32
  }
}

</mosaic_0001>

<llo_original>
// kernel: unnormalize.1
$region0: #{unnormalize.1}
  #allocation0 [shape = 'u32[]', space=smem, size = 0x4, offset = 0x4, fixed_abs, tag = 'smem constant byte address 0x4 - core index']
  #allocation1 [shape = 'u32[72,128]{1,0:T(1,128)}', space=vmem, size = 0x9000, scoped, tag = 'internal scratch']
  %s0 = inlined_call_operand.vmem [shape: f32[2,4,2,128], index: 0, kind: input, shape index: {}]
  %s1 = inlined_call_operand.vmem [shape: f32[1,4,1,1], index: 1, kind: input, shape index: {}]
  %s2 = inlined_call_operand.vmem [shape: f32[1,4,1,1], index: 2, kind: input, shape index: {}]
  %s3 = inlined_call_operand.vmem [shape: f32[2,4,2,128], index: 3, kind: output, shape index: {}]
  %s4 = sld [smem:[#allocation0]]
  $region45: #{unnormalize.1} parent=0
    _
  %s6 = ssub.s32 1, %s4
  %s7 = scalar_select 0, %s6, %s4
  loop: start=0, step=1, limit=4
  $region2: #{unnormalize.1} parent=0 // loop_pre_header
    _
  $region3: #{unnormalize.1} parent=0 // loop_header
    %s9 = sphi 0, %s13
    %p10 = scmp.ge.s32.totalorder %s9, 4
    %s16 = sphi 0, %s28
    %s17 = sphi 0, %s24
    %s18 = sphi 0, %s16
    %s19 = sphi 0, %s17
    %s20 = sphi 0, %s18
    %s21 = sphi 0, %s19
    %s33 = sphi 0, %s35
    %s36 = sphi 0, %s33
    %s37 = sphi 0, %s36
    %s53 = sphi 0, %s37
    %s57 = sphi 0, %s57
    %s59 = sphi 0, %s57
    %s60 = sphi 0, %s59
    %s74 = sphi 0, %s60
    %s78 = sphi 0, %s78
    %s80 = sphi 0, %s78
    %s81 = sphi 0, %s80
    %s95 = sphi 0, %s81
    %s103 = sphi 0, %s105
    %s106 = sphi 0, %s103
    %s107 = sphi 0, %s106
    %s123 = sphi 0, %s107
  $region4: #{unnormalize.1} parent=0 // loop_header_branch
    %12 = sbr.rel (%p10) target = $region8
  $region5: #{unnormalize.1} parent=0 // loop_body
    %s14 = ssub.s32 %s9, 1
    %s15 = ssub.s32 %s9, 2
    %s22 = sadd.s32 1, %s17
    %p23 = scmp.ge.s32.totalorder %s22, 1
    %s24 = scalar_select %p23, 0, %s22
    %s25 = sadd.s32 1, %s16
    %s26 = scalar_select %p23, %s25, %s16
    %p27 = scmp.ge.s32.totalorder %s26, 2
    %s28 = scalar_select %p27, 0, %s26
    %s29 = ssub.s32 %s16, %s28
    %s30 = ssub.s32 %s17, %s24
    %s31 = sor.u32 %s29, %s30
    %p32 = scmp.eq.s32.totalorder %s31, 0
    %s34 = sadd.s32 %s33, 1
    %s35 = scalar_select %p32, %s33, %s34
    %p38 = pneg %p32
    %p39 = scmp.eq.s32.totalorder %s9, 1
    %p40 = por %p38, %p39
    %p41 = scmp.ne.s32.totalorder %s33, %s36
    %p42 = scmp.eq.s32.totalorder %s9, 0
    %p43 = por %p41, %p42
    %p44 = scmp.ne.s32.totalorder %s33, %s36
    %p45 = scmp.eq.s32.totalorder %s14, 1
    %p46 = por %p44, %p45
    %p47 = scmp.ne.s32.totalorder %s36, %s37
    %p48 = scmp.eq.s32.totalorder %s14, 0
    %p49 = por %p47, %p48
    %p50 = scmp.ne.s32.totalorder %s36, %s37
    %p51 = scmp.eq.s32.totalorder %s15, 1
    %p52 = por %p50, %p51
    %p54 = scmp.ne.s32.totalorder %s37, %s53
    %p55 = scmp.eq.s32.totalorder %s15, 0
    %p56 = por %p54, %p55
    %s58 = sadd.s32 %s57, 1
    %p61 = scmp.eq.s32.totalorder %s9, 1
    %p62 = scmp.ne.s32.totalorder %s57, %s59
    %p63 = scmp.eq.s32.totalorder %s9, 0
    %p64 = por %p62, %p63
    %p65 = scmp.ne.s32.totalorder %s57, %s59
    %p66 = scmp.eq.s32.totalorder %s14, 1
    %p67 = por %p65, %p66
    %p68 = scmp.ne.s32.totalorder %s59, %s60
    %p69 = scmp.eq.s32.totalorder %s14, 0
    %p70 = por %p68, %p69
    %p71 = scmp.ne.s32.totalorder %s59, %s60
    %p72 = scmp.eq.s32.totalorder %s15, 1
    %p73 = por %p71, %p72
    %p75 = scmp.ne.s32.totalorder %s60, %s74
    %p76 = scmp.eq.s32.totalorder %s15, 0
    %p77 = por %p75, %p76
    %s79 = sadd.s32 %s78, 1
    %p82 = scmp.eq.s32.totalorder %s9, 1
    %p83 = scmp.ne.s32.totalorder %s78, %s80
    %p84 = scmp.eq.s32.totalorder %s9, 0
    %p85 = por %p83, %p84
    %p86 = scmp.ne.s32.totalorder %s78, %s80
    %p87 = scmp.eq.s32.totalorder %s14, 1
    %p88 = por %p86, %p87
    %p89 = scmp.ne.s32.totalorder %s80, %s81
    %p90 = scmp.eq.s32.totalorder %s14, 0
    %p91 = por %p89, %p90
    %p92 = scmp.ne.s32.totalorder %s80, %s81
    %p93 = scmp.eq.s32.totalorder %s15, 1
    %p94 = por %p92, %p93
    %p96 = scmp.ne.s32.totalorder %s81, %s95
    %p97 = scmp.eq.s32.totalorder %s15, 0
    %p98 = por %p96, %p97
    %s99 = ssub.s32 %s16, %s28
    %s100 = ssub.s32 %s17, %s24
    %s101 = sor.u32 %s99, %s100
    %p102 = scmp.eq.s32.totalorder %s101, 0
    %s104 = sadd.s32 %s103, 1
    %s105 = scalar_select %p102, %s103, %s104
    %p108 = pneg %p102
    %p109 = scmp.eq.s32.totalorder %s9, 1
    %p110 = por %p108, %p109
    %p111 = scmp.ne.s32.totalorder %s103, %s106
    %p112 = scmp.eq.s32.totalorder %s9, 0
    %p113 = por %p111, %p112
    %p114 = scmp.ne.s32.totalorder %s103, %s106
    %p115 = scmp.eq.s32.totalorder %s14, 1
    %p116 = por %p114, %p115
    %p117 = scmp.ne.s32.totalorder %s106, %s107
    %p118 = scmp.eq.s32.totalorder %s14, 0
    %p119 = por %p117, %p118
    %p120 = scmp.ne.s32.totalorder %s106, %s107
    %p121 = scmp.eq.s32.totalorder %s15, 1
    %p122 = por %p120, %p121
    %p124 = scmp.ne.s32.totalorder %s107, %s123
    %p125 = scmp.eq.s32.totalorder %s15, 0
    %p126 = por %p124, %p125
    %p127 = scmp.le.s32.totalorder 1, %s9
    %p128 = scmp.lt.s32.totalorder %s9, 3
    %p129 = pnand %p127, %p128
    %p130 = pneg %p129
    // Predicated region
    $region9: #{unnormalize.1} parent=5 // pred_check
      _
    $region10: #{unnormalize.1} parent=5 // pred_check_branch
      %132 = sbr.rel (%p129) target = $region12
    $region11: #{unnormalize.1} parent=5 // pred_region
      %s133 = ssub.s32 %s9, 1
      // Predicated region
      $region13: #{unnormalize.1} parent=11 // pred_check
        %p134 = pneg %p70
      $region14: #{unnormalize.1} parent=11 // pred_check_branch
        %136 = sbr.rel (%p134) target = $region16
      $region15: #{unnormalize.1} parent=11 // pred_region
        _
      $region16: #{unnormalize.1} parent=11 // pred_fallthru
        _
      // Predicated region
      $region17: #{unnormalize.1} parent=11 // pred_check
        %p137 = pneg %p91
      $region18: #{unnormalize.1} parent=11 // pred_check_branch
        %139 = sbr.rel (%p137) target = $region20
      $region19: #{unnormalize.1} parent=11 // pred_region
        _
      $region20: #{unnormalize.1} parent=11 // pred_fallthru
        _
    $region12: #{unnormalize.1} parent=5 // pred_fallthru
      _
    %p140 = scmp.lt.s32.totalorder %s9, 2
    // Predicated region
    $region21: #{unnormalize.1} parent=5 // pred_check
      %p141 = pneg %p140
    $region22: #{unnormalize.1} parent=5 // pred_check_branch
      %143 = sbr.rel (%p141) target = $region24
    $region23: #{unnormalize.1} parent=5 // pred_region
      // Predicated region
      $region25: #{unnormalize.1} parent=23 // pred_check
        %p144 = pneg %p43
      $region26: #{unnormalize.1} parent=23 // pred_check_branch
        %146 = sbr.rel (%p144) target = $region28
      $region27: #{unnormalize.1} parent=23 // pred_region
        %p147 = scmp.lt.s32.totalorder %s16, 1
        %s148 = scalar_select %p147, %s16, 1
        %p149 = scmp.lt.s32.totalorder %s17, 0
        %s150 = scalar_select %p149, %s17, 0
        %s151 = smul.addr %s148, 4
        %s152 = sadd.s32 %s150, %s151
        %s153 = smul.addr %s152, 2
        %s154 = scalar_lea.vmem %s0, %s153
      $region28: #{unnormalize.1} parent=23 // pred_fallthru
        _
    $region24: #{unnormalize.1} parent=5 // pred_fallthru
      _
    %p155 = scmp.le.s32.totalorder 1, %s9
    %p156 = scmp.lt.s32.totalorder %s9, 3
    %p157 = pnand %p155, %p156
    %p158 = pneg %p157
    // Predicated region
    $region29: #{unnormalize.1} parent=5 // pred_check
      _
    $region30: #{unnormalize.1} parent=5 // pred_check_branch
      %160 = sbr.rel (%p157) target = $region32
    $region31: #{unnormalize.1} parent=5 // pred_region
      %s161 = ssub.s32 %s9, 1
      %p162 = scmp.lt.s32.totalorder %s18, 1
      %s163 = scalar_select %p162, %s18, 1
      %p164 = scmp.lt.s32.totalorder %s19, 0
      %s165 = scalar_select %p164, %s19, 0
      %s166 = smul.addr %s163, 4
      %s167 = sadd.s32 %s165, %s166
      %s168 = smul.addr %s167, 2
      %s169 = scalar_lea.vmem %s0, %s168
      %p170 = pneg %p49
      %p171 = pneg %p46
      %p172 = pneg %p70
      %p173 = pneg %p67
      %p174 = pneg %p91
      %p175 = pneg %p88
      %p176 = pneg %p119
      %p177 = pneg %p116
      %p178 = scmp.lt.s32.totalorder %s18, 1
      %s179 = scalar_select %p178, %s18, 1
      %p180 = scmp.lt.s32.totalorder %s19, 0
      %s181 = scalar_select %p180, %s19, 0
      %s182 = smul.addr %s179, 4
      %s183 = sadd.s32 %s181, %s182
      %s184 = smul.addr %s183, 2
      %s185 = scalar_lea.vmem %s3, %s184
      %p186 = scmp.lt.s32.totalorder %s18, 1
      %s187 = scalar_select %p186, %s18, 1
      %p188 = scmp.lt.s32.totalorder %s19, 0
      %s189 = scalar_select %p188, %s19, 0
      %s190 = smul.addr %s187, 4
      %s191 = sadd.s32 %s189, %s190
      %s192 = smul.addr %s191, 2
      %s193 = scalar_lea.vmem %s0, %s192
      %p194 = scmp.lt.s32.totalorder %s18, 1
      %s195 = scalar_select %p194, %s18, 1
      %p196 = scmp.lt.s32.totalorder %s19, 0
      %s197 = scalar_select %p196, %s19, 0
      %s198 = smul.addr %s195, 4
      %s199 = sadd.s32 %s197, %s198
      %s200 = smul.addr %s199, 2
      %s201 = scalar_lea.vmem %s3, %s200
      %v202 = vld [vmem:[%s193] sm:$0x3]
      %v203 = vld [vmem:[%s193 + $0x2] sm:$0x3]
      %v204 = vld [vmem:[%s193 + $0x4] sm:$0x3]
      %v205 = vld [vmem:[%s193 + $0x6] sm:$0x3]
      %v206 = vld [vmem:[%s1] sm:$0x1]
      %v207 = vld [vmem:[%s1 + $0x1] sm:$0x1]
      %v208 = vld [vmem:[%s1 + $0x2] sm:$0x1]
      %v209 = vld [vmem:[%s1 + $0x3] sm:$0x1]
      %v214 = vperm.slane %v206, 0
      %v215 = vperm.slane %v207, 0
      %v216 = vperm.slane %v208, 0
      %v217 = vperm.slane %v209, 0
      %218 = vset.pattern.permute.xlu0 0
      %219 = vperm.xlu0 %218, %v214
      %v220 = vpop.permute.xlu0 %219
      %222 = vset.pattern.permute.xlu0 0
      %223 = vperm.xlu0 %222, %v215
      %v224 = vpop.permute.xlu0 %223
      %226 = vset.pattern.permute.xlu0 0
      %227 = vperm.xlu0 %226, %v216
      %v228 = vpop.permute.xlu0 %227
      %230 = vset.pattern.permute.xlu0 0
      %231 = vperm.xlu0 %230, %v217
      %v232 = vpop.permute.xlu0 %231
      %v234 = vmul.f32 %v202, %v220
      %v235 = vmul.f32 %v203, %v224
      %v236 = vmul.f32 %v204, %v228
      %v237 = vmul.f32 %v205, %v232
      %v238 = vld [vmem:[%s2] sm:$0x1]
      %v239 = vld [vmem:[%s2 + $0x1] sm:$0x1]
      %v240 = vld [vmem:[%s2 + $0x2] sm:$0x1]
      %v241 = vld [vmem:[%s2 + $0x3] sm:$0x1]
      %v246 = vperm.slane %v238, 0
      %v247 = vperm.slane %v239, 0
      %v248 = vperm.slane %v240, 0
      %v249 = vperm.slane %v241, 0
      %250 = vset.pattern.permute.xlu0 0
      %251 = vperm.xlu0 %250, %v246
      %v252 = vpop.permute.xlu0 %251
      %254 = vset.pattern.permute.xlu0 0
      %255 = vperm.xlu0 %254, %v247
      %v256 = vpop.permute.xlu0 %255
      %258 = vset.pattern.permute.xlu0 0
      %259 = vperm.xlu0 %258, %v248
      %v260 = vpop.permute.xlu0 %259
      %262 = vset.pattern.permute.xlu0 0
      %263 = vperm.xlu0 %262, %v249
      %v264 = vpop.permute.xlu0 %263
      %v266 = vadd.f32 %v234, %v252
      %v267 = vadd.f32 %v235, %v256
      %v268 = vadd.f32 %v236, %v260
      %v269 = vadd.f32 %v237, %v264
      %270 = vst [vmem:[%s201] sm:$0x3] %v266
      %271 = vst [vmem:[%s201 + $0x2] sm:$0x3] %v267
      %272 = vst [vmem:[%s201 + $0x4] sm:$0x3] %v268
      %273 = vst [vmem:[%s201 + $0x6] sm:$0x3] %v269
      %p274 = scmp.lt.s32.totalorder %s18, 1
      %s275 = scalar_select %p274, %s18, 1
      %p276 = scmp.lt.s32.totalorder %s19, 0
      %s277 = scalar_select %p276, %s19, 0
      %s278 = smul.addr %s275, 4
      %s279 = sadd.s32 %s277, %s278
      %s280 = smul.addr %s279, 2
      %s281 = scalar_lea.vmem %s3, %s280
      // Predicated region
      $region33: #{unnormalize.1} parent=31 // pred_check
        %p282 = pneg %p116
      $region34: #{unnormalize.1} parent=31 // pred_check_branch
        %284 = sbr.rel (%p282) target = $region36
      $region35: #{unnormalize.1} parent=31 // pred_region
        _
      $region36: #{unnormalize.1} parent=31 // pred_fallthru
        _
    $region32: #{unnormalize.1} parent=5 // pred_fallthru
      _
    %p285 = scmp.le.s32.totalorder 2, %s9
    // Predicated region
    $region37: #{unnormalize.1} parent=5 // pred_check
      %p286 = pneg %p285
    $region38: #{unnormalize.1} parent=5 // pred_check_branch
      %288 = sbr.rel (%p286) target = $region40
    $region39: #{unnormalize.1} parent=5 // pred_region
      %s289 = ssub.s32 %s9, 2
      // Predicated region
      $region41: #{unnormalize.1} parent=39 // pred_check
        %p290 = pneg %p122
      $region42: #{unnormalize.1} parent=39 // pred_check_branch
        %292 = sbr.rel (%p290) target = $region44
      $region43: #{unnormalize.1} parent=39 // pred_region
        %p293 = scmp.lt.s32.totalorder %s20, 1
        %s294 = scalar_select %p293, %s20, 1
        %p295 = scmp.lt.s32.totalorder %s21, 0
        %s296 = scalar_select %p295, %s21, 0
        %s297 = smul.addr %s294, 4
        %s298 = sadd.s32 %s296, %s297
        %s299 = smul.addr %s298, 2
        %s300 = scalar_lea.vmem %s3, %s299
      $region44: #{unnormalize.1} parent=39 // pred_fallthru
        _
    $region40: #{unnormalize.1} parent=5 // pred_fallthru
      _
  $region6: #{unnormalize.1} parent=0 // loop_footer
    %s13 = sadd.s32 1, %s9
  $region7: #{unnormalize.1} parent=0 // loop_footer_branch
    %8 = sbr.rel target = $region3
  $region8: #{unnormalize.1} parent=0 // loop_exit
    _

</llo_original>
